<compile_context>
chip_gen: v7x
topology: tpu7x:2x2x1
jax: 0.10.0
libtpu: 0.0.40
codegen_flags: <defaults>
</compile_context>

<pallas_src>
import jax
import jax.numpy as jnp
from jax import lax
from jax.experimental import pallas as pl
from jax.experimental.pallas import tpu as pltpu

# ---- module hyper-parameters (mirrors __init__ defaults) --------------------
LORA_RANK = 8
LORA_ALPHA = 8
LORA_SCALE = float(LORA_ALPHA) / float(LORA_RANK)   # peft scale alpha/r
EPS = 1e-12                                          # rsqrt guard (also protects padded rows)


def _round_up(n, m):
    return ((n + m - 1) // m) * m


# ---- Pallas kernel: entire forward hot path ---------------------------------
def cbm_lora_kernel(scale_ref,      # SMEM (1,)        logit_scale
                    x_img_ref,      # VMEM (TB, Dh)    bf16 pooled image features
                    x_txt_ref,      # VMEM (C,  Dh)    bf16 pooled concept-text features
                    w_vis_ref,      # VMEM (Dp, Dh)    bf16 visual_projection.weight (out, in)
                    lora_a_ref,     # VMEM (r,  Dh)    bf16 lora_A.weight
                    lora_b_ref,     # VMEM (Dp, r)     bf16 lora_B.weight
                    w_txt_ref,      # VMEM (Dp, Dh)    bf16 text_projection.weight
                    w_cbl_ref,      # VMEM (C,  C)     bf16 cbl.weight
                    w_head_ref,     # VMEM (K,  C)     bf16 head.weight
                    cbl_out_ref,    # VMEM (TB, C)     f32
                    head_out_ref):  # VMEM (TB, K)     f32
    f32 = jnp.float32
    bf16 = jnp.bfloat16

    def dot_t(a, b):
        # a @ b.T : contract trailing dims of both operands (weights stay in
        # native (out, in) layout), f32 accumulation on the MXU.
        return lax.dot_general(a, b, (((1,), (1,)), ((), ())),
                               preferred_element_type=f32)

    x_img = x_img_ref[...]                                              # (TB, Dh) bf16

    # Visual projection + activation-path LoRA (no weight merge).
    img = dot_t(x_img, w_vis_ref[...])                                  # (TB, Dp) f32
    u = dot_t(x_img, lora_a_ref[...])                                   # (TB, r)  f32
    img = img + LORA_SCALE * dot_t(u.astype(bf16), lora_b_ref[...])     # (TB, Dp) f32

    # Text projection.
    txt = dot_t(x_txt_ref[...], w_txt_ref[...])                         # (C, Dp)  f32

    # L2 normalization. The image-side 1/||img|| and logit_scale are folded
    # into one (TB,1) row scale applied after the similarity matmul (saves the
    # (TB,Dp) rescale + separate scalar multiply); rsqrt runs on the EUP.
    inv_i = lax.rsqrt(jnp.sum(img * img, axis=-1, keepdims=True) + EPS)  # (TB,1)
    inv_t = lax.rsqrt(jnp.sum(txt * txt, axis=-1, keepdims=True) + EPS)  # (C, 1)
    txt_n = (txt * inv_t).astype(bf16)                                   # (C, Dp) bf16

    raw = dot_t(img.astype(bf16), txt_n)                                 # (TB, C) f32
    logits = raw * (scale_ref[0] * inv_i)                                # logits_per_image

    # Concept bottleneck + classification head; results kept in vregs and
    # written once each as lane-dense f32 stores.
    cbl = dot_t(logits.astype(bf16), w_cbl_ref[...])                     # (TB, C) f32
    cbl_out_ref[...] = cbl
    head_out_ref[...] = dot_t(cbl.astype(bf16), w_head_ref[...])         # (TB, K) f32


# ---- wrapper ----------------------------------------------------------------
def cbm_forward(x_img, x_txt, logit_scale, w_vis, lora_a, lora_b,
                w_txt, w_cbl, w_head, *, batch_tile=128):
    """All weights in PyTorch nn.Linear convention: (out_features, in_features).
    NOTE: in production the bf16 cast / 128-padding of the (static) weights is
    done once at load time, not per call; it is inlined here to keep the script
    self-contained."""
    f32, bf16 = jnp.float32, jnp.bfloat16

    B, Dh = x_img.shape
    Dp = w_vis.shape[0]
    r = lora_a.shape[0]
    C = w_cbl.shape[0]          # num_concepts (== number of concept texts)
    K = w_head.shape[0]         # num_classes

    # Lane-dense padded sizes (last dim -> multiple of 128 lanes; batch -> 16
    # sublanes for packed bf16 rows). Zero padding is exact for every matmul,
    # and EPS keeps the padded-row norms finite.
    Dh_p = _round_up(Dh, 128)
    Dp_p = _round_up(Dp, 128)
    r_p = _round_up(r, 128)
    C_p = _round_up(C, 128)
    K_p = _round_up(K, 128)
    TB = min(batch_tile, _round_up(B, 16))
    B_p = _round_up(B, TB)

    def pad2(a, rows, cols, dt):
        a = a.astype(dt)
        return jnp.pad(a, ((0, rows - a.shape[0]), (0, cols - a.shape[1])))

    xi = pad2(x_img, B_p, Dh_p, bf16)
    xt = pad2(x_txt, C_p, Dh_p, bf16)
    wv = pad2(w_vis, Dp_p, Dh_p, bf16)
    la = pad2(lora_a, r_p, Dh_p, bf16)
    lb = pad2(lora_b, Dp_p, r_p, bf16)
    wt = pad2(w_txt, Dp_p, Dh_p, bf16)
    wc = pad2(w_cbl, C_p, C_p, bf16)
    wh = pad2(w_head, K_p, C_p, bf16)
    scale_arr = jnp.asarray([logit_scale], dtype=f32)

    grid = (B_p // TB,)
    smem = pltpu.MemorySpace.SMEM

    in_specs = [
        pl.BlockSpec(memory_space=smem),                       # logit_scale (scalar)
        pl.BlockSpec((TB, Dh_p), lambda i: (i, 0)),            # x_img   (batch-tiled)
        pl.BlockSpec((C_p, Dh_p), lambda i: (0, 0)),           # x_txt   (resident)
        pl.BlockSpec((Dp_p, Dh_p), lambda i: (0, 0)),          # w_vis
        pl.BlockSpec((r_p, Dh_p), lambda i: (0, 0)),           # lora_A
        pl.BlockSpec((Dp_p, r_p), lambda i: (0, 0)),           # lora_B
        pl.BlockSpec((Dp_p, Dh_p), lambda i: (0, 0)),          # w_txt
        pl.BlockSpec((C_p, C_p), lambda i: (0, 0)),            # w_cbl
        pl.BlockSpec((K_p, C_p), lambda i: (0, 0)),            # w_head
    ]
    out_specs = (
        pl.BlockSpec((TB, C_p), lambda i: (i, 0)),
        pl.BlockSpec((TB, K_p), lambda i: (i, 0)),
    )

    # Advisory cost model for the XLA scheduler.
    flops = 2 * (B_p * Dh_p * Dp_p + B_p * Dh_p * r_p + B_p * r_p * Dp_p
                 + C_p * Dh_p * Dp_p + B_p * Dp_p * C_p + B_p * C_p * C_p
                 + B_p * C_p * K_p)
    bytes_accessed = (2 * (B_p * Dh_p + C_p * Dh_p + Dp_p * Dh_p + r_p * Dh_p
                           + Dp_p * r_p + Dp_p * Dh_p + C_p * C_p + K_p * C_p)
                      + 4 * (B_p * C_p + B_p * K_p) + 4)
    cost = pl.CostEstimate(flops=flops, transcendentals=B_p + C_p,
                           bytes_accessed=bytes_accessed)

    cbl_p, head_p = pl.pallas_call(
        cbm_lora_kernel,
        grid=grid,
        in_specs=in_specs,
        out_specs=out_specs,
        out_shape=(jax.ShapeDtypeStruct((B_p, C_p), f32),
                   jax.ShapeDtypeStruct((B_p, K_p), f32)),
        compiler_params=pltpu.CompilerParams(
            dimension_semantics=("parallel",),         # batch tiles shard across v7x TCs
            vmem_limit_bytes=48 * 1024 * 1024,         # fits v7x 64 MiB with headroom
        ),
        cost_estimate=cost,
    )(scale_arr, xi, xt, wv, la, lb, wt, wc, wh)

    return cbl_p[:B, :C], head_p[:B, :K]


# ---- pure-JAX reference (mirrors the PyTorch forward) ------------------------
def cbm_reference(x_img, x_txt, logit_scale, w_vis, lora_a, lora_b,
                  w_txt, w_cbl, w_head, compute_dtype=jnp.float32):
    """compute_dtype=f32 -> faithful PyTorch math; bf16 -> same operand
    precision policy as the kernel (f32 accumulation)."""
    f32 = jnp.float32
    dt = compute_dtype

    def dot_t(a, b):
        return lax.dot_general(a.astype(dt), b.astype(dt),
                               (((1,), (1,)), ((), ())),
                               preferred_element_type=f32)

    img = dot_t(x_img, w_vis) + LORA_SCALE * dot_t(dot_t(x_img, lora_a), lora_b)
    txt = dot_t(x_txt, w_txt)
    inv_i = lax.rsqrt(jnp.sum(img * img, -1, keepdims=True) + EPS)
    inv_t = lax.rsqrt(jnp.sum(txt * txt, -1, keepdims=True) + EPS)
    logits = dot_t(img, txt * inv_t) * (logit_scale * inv_i)   # logits_per_image
    cbl = dot_t(logits, w_cbl)
    head = dot_t(cbl, w_head)
    return cbl, head


if __name__ == "__main__":
    # small shapes consistent with the module
    B = 2            # image batch
    Dh = 32          # backbone hidden size
    Dp = 16          # projection dim
    C = 8            # num_concepts (== logits_per_image columns)
    K = 4            # num_classes

    key = jax.random.PRNGKey(0)
    ks = jax.random.split(key, 8)
    x_img = jax.random.normal(ks[0], (B, Dh), dtype=jnp.float32)          # pooled image features
    x_txt = jax.random.normal(ks[1], (C, Dh), dtype=jnp.float32)          # pooled concept-text features
    w_vis = jax.random.normal(ks[2], (Dp, Dh), dtype=jnp.float32) * 0.1   # visual_projection.weight
    lora_a = jax.random.normal(ks[3], (LORA_RANK, Dh), dtype=jnp.float32) * 0.05
    lora_b = jax.random.normal(ks[4], (Dp, LORA_RANK), dtype=jnp.float32) * 0.05
    w_txt = jax.random.normal(ks[5], (Dp, Dh), dtype=jnp.float32) * 0.1   # text_projection.weight
    w_cbl = jax.random.normal(ks[6], (C, C), dtype=jnp.float32) * 0.2     # cbl.weight
    w_head = jax.random.normal(ks[7], (K, C), dtype=jnp.float32) * 0.2    # head.weight
    logit_scale = 100.0  # exp(4.6052), CLIP default

    cbl_out, head_out = cbm_forward(x_img, x_txt, logit_scale, w_vis, lora_a,
                                    lora_b, w_txt, w_cbl, w_head)
    jax.block_until_ready((cbl_out, head_out))
    assert cbl_out.shape == (B, C) and head_out.shape == (B, K)

    # 1) Precision-policy-matched reference (bf16 operands, f32 accumulation).
    ref_cbl_m, ref_head_m = cbm_reference(x_img, x_txt, logit_scale, w_vis, lora_a,
                                          lora_b, w_txt, w_cbl, w_head,
                                          compute_dtype=jnp.bfloat16)
    assert jnp.allclose(cbl_out, ref_cbl_m, rtol=5e-3, atol=5e-2)
    assert jnp.allclose(head_out, ref_head_m, rtol=5e-3, atol=5e-2)

    # 2) Sanity check against the faithful f32 reference (bf16-operand tolerance).
    ref_cbl_f, ref_head_f = cbm_reference(x_img, x_txt, logit_scale, w_vis, lora_a,
                                          lora_b, w_txt, w_cbl, w_head,
                                          compute_dtype=jnp.float32)
    assert jnp.allclose(cbl_out, ref_cbl_f, rtol=1e-1, atol=1.0)
    assert jnp.allclose(head_out, ref_head_f, rtol=1e-1, atol=1.0)

    print("KERNEL_OK")
</pallas_src>

<mosaic_0001>
module attributes {stable_mosaic.version = 11 : i64} {
  func.func @cbm_lora_kernel(%arg0: i32, %arg1: memref<1xf32, #tpu.memory_space<smem>>, %arg2: memref<16x128xbf16, #tpu.memory_space<vmem>>, %arg3: memref<128x128xbf16, #tpu.memory_space<vmem>>, %arg4: memref<128x128xbf16, #tpu.memory_space<vmem>>, %arg5: memref<128x128xbf16, #tpu.memory_space<vmem>>, %arg6: memref<128x128xbf16, #tpu.memory_space<vmem>>, %arg7: memref<128x128xbf16, #tpu.memory_space<vmem>>, %arg8: memref<128x128xbf16, #tpu.memory_space<vmem>>, %arg9: memref<128x128xbf16, #tpu.memory_space<vmem>>, %arg10: memref<16x128xf32, #tpu.memory_space<vmem>>, %arg11: memref<16x128xf32, #tpu.memory_space<vmem>>) attributes {dimension_semantics = [#tpu.dimension_semantics<parallel>], iteration_bounds = array<i64: 1>, scalar_prefetch = 0 : i64, scratch_operands = 0 : i64, tpu.core_type = #tpu.core_type<tc>, window_params = [{transform_indices = @transform_0, window_bounds = array<i64: 1>}, {transform_indices = @transform_1, window_bounds = array<i64: 16, 128>}, {pipeline_mode = #tpu.pipeline_mode<synchronous>, transform_indices = @transform_2, window_bounds = array<i64: 128, 128>}, {pipeline_mode = #tpu.pipeline_mode<synchronous>, transform_indices = @transform_3, window_bounds = array<i64: 128, 128>}, {pipeline_mode = #tpu.pipeline_mode<synchronous>, transform_indices = @transform_4, window_bounds = array<i64: 128, 128>}, {pipeline_mode = #tpu.pipeline_mode<synchronous>, transform_indices = @transform_5, window_bounds = array<i64: 128, 128>}, {pipeline_mode = #tpu.pipeline_mode<synchronous>, transform_indices = @transform_6, window_bounds = array<i64: 128, 128>}, {pipeline_mode = #tpu.pipeline_mode<synchronous>, transform_indices = @transform_7, window_bounds = array<i64: 128, 128>}, {pipeline_mode = #tpu.pipeline_mode<synchronous>, transform_indices = @transform_8, window_bounds = array<i64: 128, 128>}, {transform_indices = @transform_9, window_bounds = array<i64: 16, 128>}, {transform_indices = @transform_10, window_bounds = array<i64: 16, 128>}]} {
    %c0 = arith.constant 0 : index
    %c0_0 = arith.constant 0 : index
    %0 = vector.load %arg2[%c0, %c0_0] : memref<16x128xbf16, #tpu.memory_space<vmem>>, vector<16x128xbf16>
    %c0_1 = arith.constant 0 : index
    %c0_2 = arith.constant 0 : index
    %1 = vector.load %arg4[%c0_1, %c0_2] : memref<128x128xbf16, #tpu.memory_space<vmem>>, vector<128x128xbf16>
    %cst = arith.constant dense<0.000000e+00> : vector<16x128xf32>
    %2 = tpu.matmul %0, %1, %cst {dimension_numbers = #tpu.dot_dimension_numbers<[1], [1], [0], [0], [0, 0, 1, 0], [], []>} : vector<16x128xbf16>, vector<128x128xbf16>, vector<16x128xf32> -> vector<16x128xf32>
    %c0_3 = arith.constant 0 : index
    %c0_4 = arith.constant 0 : index
    %3 = vector.load %arg5[%c0_3, %c0_4] : memref<128x128xbf16, #tpu.memory_space<vmem>>, vector<128x128xbf16>
    %cst_5 = arith.constant dense<0.000000e+00> : vector<16x128xf32>
    %4 = tpu.matmul %0, %3, %cst_5 {dimension_numbers = #tpu.dot_dimension_numbers<[1], [1], [0], [0], [0, 0, 1, 0], [], []>} : vector<16x128xbf16>, vector<128x128xbf16>, vector<16x128xf32> -> vector<16x128xf32>
    %5 = arith.truncf %4 : vector<16x128xf32> to vector<16x128xbf16>
    %c0_6 = arith.constant 0 : index
    %c0_7 = arith.constant 0 : index
    %6 = vector.load %arg6[%c0_6, %c0_7] : memref<128x128xbf16, #tpu.memory_space<vmem>>, vector<128x128xbf16>
    %cst_8 = arith.constant dense<0.000000e+00> : vector<16x128xf32>
    %7 = tpu.matmul %5, %6, %cst_8 {dimension_numbers = #tpu.dot_dimension_numbers<[1], [1], [0], [0], [0, 0, 1, 0], [], []>} : vector<16x128xbf16>, vector<128x128xbf16>, vector<16x128xf32> -> vector<16x128xf32>
    %cst_9 = arith.constant 1.000000e+00 : f32
    %8 = vector.broadcast %cst_9 : f32 to vector<16x128xf32>
    %9 = arith.mulf %8, %7 : vector<16x128xf32>
    %10 = arith.addf %2, %9 : vector<16x128xf32>
    %c0_10 = arith.constant 0 : index
    %c0_11 = arith.constant 0 : index
    %11 = vector.load %arg3[%c0_10, %c0_11] : memref<128x128xbf16, #tpu.memory_space<vmem>>, vector<128x128xbf16>
    %c0_12 = arith.constant 0 : index
    %c0_13 = arith.constant 0 : index
    %12 = vector.load %arg7[%c0_12, %c0_13] : memref<128x128xbf16, #tpu.memory_space<vmem>>, vector<128x128xbf16>
    %cst_14 = arith.constant dense<0.000000e+00> : vector<128x128xf32>
    %13 = tpu.matmul %11, %12, %cst_14 {dimension_numbers = #tpu.dot_dimension_numbers<[1], [1], [0], [0], [0, 0, 1, 0], [], []>} : vector<128x128xbf16>, vector<128x128xbf16>, vector<128x128xf32> -> vector<128x128xf32>
    %14 = arith.mulf %10, %10 : vector<16x128xf32>
    %cst_15 = arith.constant dense<0.000000e+00> : vector<16xf32>
    %15 = vector.multi_reduction <add>, %14, %cst_15 [1] : vector<16x128xf32> to vector<16xf32>
    %16 = vector.shape_cast %15 : vector<16xf32> to vector<16x1xf32>
    %cst_16 = arith.constant 9.99999996E-13 : f32
    %17 = vector.broadcast %cst_16 : f32 to vector<16x1xf32>
    %18 = arith.addf %16, %17 : vector<16x1xf32>
    %19 = math.rsqrt %18 : vector<16x1xf32>
    %20 = arith.mulf %13, %13 : vector<128x128xf32>
    %cst_17 = arith.constant dense<0.000000e+00> : vector<128xf32>
    %21 = vector.multi_reduction <add>, %20, %cst_17 [1] : vector<128x128xf32> to vector<128xf32>
    %22 = vector.shape_cast %21 : vector<128xf32> to vector<128x1xf32>
    %cst_18 = arith.constant 9.99999996E-13 : f32
    %23 = vector.broadcast %cst_18 : f32 to vector<128x1xf32>
    %24 = arith.addf %22, %23 : vector<128x1xf32>
    %25 = math.rsqrt %24 : vector<128x1xf32>
    %26 = vector.broadcast %25 : vector<128x1xf32> to vector<128x128xf32>
    %27 = arith.mulf %13, %26 : vector<128x128xf32>
    %28 = arith.truncf %27 : vector<128x128xf32> to vector<128x128xbf16>
    %29 = arith.truncf %10 : vector<16x128xf32> to vector<16x128xbf16>
    %cst_19 = arith.constant dense<0.000000e+00> : vector<16x128xf32>
    %30 = tpu.matmul %29, %28, %cst_19 {dimension_numbers = #tpu.dot_dimension_numbers<[1], [1], [0], [0], [0, 0, 1, 0], [], []>} : vector<16x128xbf16>, vector<128x128xbf16>, vector<16x128xf32> -> vector<16x128xf32>
    %c0_20 = arith.constant 0 : index
    %31 = memref.load %arg1[%c0_20] : memref<1xf32, #tpu.memory_space<smem>>
    %32 = vector.broadcast %31 : f32 to vector<16x1xf32>
    %33 = arith.mulf %32, %19 : vector<16x1xf32>
    %34 = vector.broadcast %33 : vector<16x1xf32> to vector<16x128xf32>
    %35 = arith.mulf %30, %34 : vector<16x128xf32>
    %36 = arith.truncf %35 : vector<16x128xf32> to vector<16x128xbf16>
    %c0_21 = arith.constant 0 : index
    %c0_22 = arith.constant 0 : index
    %37 = vector.load %arg8[%c0_21, %c0_22] : memref<128x128xbf16, #tpu.memory_space<vmem>>, vector<128x128xbf16>
    %cst_23 = arith.constant dense<0.000000e+00> : vector<16x128xf32>
    %38 = tpu.matmul %36, %37, %cst_23 {dimension_numbers = #tpu.dot_dimension_numbers<[1], [1], [0], [0], [0, 0, 1, 0], [], []>} : vector<16x128xbf16>, vector<128x128xbf16>, vector<16x128xf32> -> vector<16x128xf32>
    %c0_24 = arith.constant 0 : index
    %c0_25 = arith.constant 0 : index
    %39 = vector.load %arg10[%c0_24, %c0_25] : memref<16x128xf32, #tpu.memory_space<vmem>>, vector<16x128xf32>
    tpu.vector_store %arg10[%c0_24, %c0_25], %38 {strides = array<i32>} : memref<16x128xf32, #tpu.memory_space<vmem>>, vector<16x128xf32>,
    %40 = arith.truncf %38 : vector<16x128xf32> to vector<16x128xbf16>
    %c0_26 = arith.constant 0 : index
    %c0_27 = arith.constant 0 : index
    %41 = vector.load %arg9[%c0_26, %c0_27] : memref<128x128xbf16, #tpu.memory_space<vmem>>, vector<128x128xbf16>
    %cst_28 = arith.constant dense<0.000000e+00> : vector<16x128xf32>
    %42 = tpu.matmul %40, %41, %cst_28 {dimension_numbers = #tpu.dot_dimension_numbers<[1], [1], [0], [0], [0, 0, 1, 0], [], []>} : vector<16x128xbf16>, vector<128x128xbf16>, vector<16x128xf32> -> vector<16x128xf32>
    %c0_29 = arith.constant 0 : index
    %c0_30 = arith.constant 0 : index
    %43 = vector.load %arg11[%c0_29, %c0_30] : memref<16x128xf32, #tpu.memory_space<vmem>>, vector<16x128xf32>
    tpu.vector_store %arg11[%c0_29, %c0_30], %42 {strides = array<i32>} : memref<16x128xf32, #tpu.memory_space<vmem>>, vector<16x128xf32>,
    return
  }
  func.func @transform_0(%arg0: i32) -> i32 {
    %c0_i32 = arith.constant 0 : i32
    %c0_i32_0 = arith.constant 0 : i32
    return %c0_i32 : i32
  }
  func.func @transform_1(%arg0: i32) -> (i32, i32) {
    %c0_i32 = arith.constant 0 : i32
    %c0_i32_0 = arith.constant 0 : i32
    return %arg0, %c0_i32 : i32, i32
  }
  func.func @transform_2(%arg0: i32) -> (i32, i32) {
    %c0_i32 = arith.constant 0 : i32
    %c0_i32_0 = arith.constant 0 : i32
    %c0_i32_1 = arith.constant 0 : i32
    return %c0_i32, %c0_i32_0 : i32, i32
  }
  func.func @transform_3(%arg0: i32) -> (i32, i32) {
    %c0_i32 = arith.constant 0 : i32
    %c0_i32_0 = arith.constant 0 : i32
    %c0_i32_1 = arith.constant 0 : i32
    return %c0_i32, %c0_i32_0 : i32, i32
  }
  func.func @transform_4(%arg0: i32) -> (i32, i32) {
    %c0_i32 = arith.constant 0 : i32
    %c0_i32_0 = arith.constant 0 : i32
    %c0_i32_1 = arith.constant 0 : i32
    return %c0_i32, %c0_i32_0 : i32, i32
  }
  func.func @transform_5(%arg0: i32) -> (i32, i32) {
    %c0_i32 = arith.constant 0 : i32
    %c0_i32_0 = arith.constant 0 : i32
    %c0_i32_1 = arith.constant 0 : i32
    return %c0_i32, %c0_i32_0 : i32, i32
  }
  func.func @transform_6(%arg0: i32) -> (i32, i32) {
    %c0_i32 = arith.constant 0 : i32
    %c0_i32_0 = arith.constant 0 : i32
    %c0_i32_1 = arith.constant 0 : i32
    return %c0_i32, %c0_i32_0 : i32, i32
  }
  func.func @transform_7(%arg0: i32) -> (i32, i32) {
    %c0_i32 = arith.constant 0 : i32
    %c0_i32_0 = arith.constant 0 : i32
    %c0_i32_1 = arith.constant 0 : i32
    return %c0_i32, %c0_i32_0 : i32, i32
  }
  func.func @transform_8(%arg0: i32) -> (i32, i32) {
    %c0_i32 = arith.constant 0 : i32
    %c0_i32_0 = arith.constant 0 : i32
    %c0_i32_1 = arith.constant 0 : i32
    return %c0_i32, %c0_i32_0 : i32, i32
  }
  func.func @transform_9(%arg0: i32) -> (i32, i32) {
    %c0_i32 = arith.constant 0 : i32
    %c0_i32_0 = arith.constant 0 : i32
    return %arg0, %c0_i32 : i32, i32
  }
  func.func @transform_10(%arg0: i32) -> (i32, i32) {
    %c0_i32 = arith.constant 0 : i32
    %c0_i32_0 = arith.constant 0 : i32
    return %arg0, %c0_i32 : i32, i32
  }
}

</mosaic_0001>

<llo_original>
// kernel: tpu_custom_call.1
$region0: #{tpu_custom_call.1}
  #allocation0 [shape = 'u32[]', space=smem, size = 0x4, offset = 0x4, fixed_abs, tag = 'smem constant byte address 0x4 - core index']
  #allocation1 [shape = 'u32[144,128]{1,0:T(1,128)}', space=vmem, size = 0x12000, scoped, tag = 'internal scratch']
  #allocation2 [shape = 'f32[1]{0:T(128)S(6)}', space=smem, size = 0x200, scoped, tag = 'scoped memory for tpu_custom_call.1']
  %s0 = inlined_call_operand.<no memory space> [shape: f32[1], index: 0, kind: input, shape index: {}]
  %s1 = inlined_call_operand.hbm [shape: bf16[16,128], index: 1, kind: input, shape index: {}]
  %s2 = inlined_call_operand.hbm [shape: bf16[128,128], index: 2, kind: input, shape index: {}]
  %s3 = inlined_call_operand.hbm [shape: bf16[128,128], index: 3, kind: input, shape index: {}]
  %s4 = inlined_call_operand.hbm [shape: bf16[128,128], index: 4, kind: input, shape index: {}]
  %s5 = inlined_call_operand.hbm [shape: bf16[128,128], index: 5, kind: input, shape index: {}]
  %s6 = inlined_call_operand.hbm [shape: bf16[128,128], index: 6, kind: input, shape index: {}]
  %s7 = inlined_call_operand.hbm [shape: bf16[128,128], index: 7, kind: input, shape index: {}]
  %s8 = inlined_call_operand.hbm [shape: bf16[128,128], index: 8, kind: input, shape index: {}]
  %s9 = inlined_call_operand.hbm [shape: f32[16,128], index: 9, kind: output, shape index: {0}]
  %s10 = inlined_call_operand.hbm [shape: f32[16,128], index: 10, kind: output, shape index: {1}]
  %11 = xla_tuple %s9, %s10
  %s12 = sld [smem:[#allocation0]]
  $region86: #{tpu_custom_call.1} parent=0
    _
  %s14 = ssub.s32 1, %s12
  %s15 = scalar_select 0, %s14, %s12
  %16 = sst [smem:[#allocation2]] %s0
  $region1: #{tpu_custom_call.1} parent=0
    #allocation3 [shape = 'u8[4096]{0}', space=vmem, size = 0x1000, scoped, tag = 'input window, operand 1, single buffered']
    #allocation4 [shape = 's32[1]{0}', space=sflag, size = 0x4, scoped, tag = 'scoped memory for tpu_custom_call.1']
    #allocation5 [shape = 's32[1]{0}', space=sflag, size = 0x4, scoped, tag = 'scoped memory for tpu_custom_call.1']
    #allocation6 [shape = 'u8[32768]{0}', space=vmem, size = 0x8000, scoped, tag = 'input window, operand 2, single buffered']
    #allocation7 [shape = 's32[1]{0}', space=sflag, size = 0x4, scoped, tag = 'scoped memory for tpu_custom_call.1']
    #allocation8 [shape = 'u8[32768]{0}', space=vmem, size = 0x8000, scoped, tag = 'input window, operand 3, single buffered']
    #allocation9 [shape = 'u8[32768]{0}', space=vmem, size = 0x8000, scoped, tag = 'input window, operand 4, single buffered']
    #allocation10 [shape = 's32[1]{0}', space=sflag, size = 0x4, scoped, tag = 'scoped memory for tpu_custom_call.1']
    #allocation11 [shape = 'u8[32768]{0}', space=vmem, size = 0x8000, scoped, tag = 'input window, operand 5, single buffered']
    #allocation12 [shape = 'u8[32768]{0}', space=vmem, size = 0x8000, scoped, tag = 'input window, operand 6, single buffered']
    #allocation13 [shape = 's32[1]{0}', space=sflag, size = 0x4, scoped, tag = 'scoped memory for tpu_custom_call.1']
    #allocation14 [shape = 'u8[32768]{0}', space=vmem, size = 0x8000, scoped, tag = 'input window, operand 7, single buffered']
    #allocation15 [shape = 'u8[32768]{0}', space=vmem, size = 0x8000, scoped, tag = 'input window, operand 8, single buffered']
    #allocation16 [shape = 's32[1]{0}', space=sflag, size = 0x4, scoped, tag = 'scoped memory for tpu_custom_call.1']
    #allocation17 [shape = 'u8[8192]{0}', space=vmem, size = 0x2000, scoped, tag = 'output window, operand 0, single buffered']
    #allocation18 [shape = 'u8[8192]{0}', space=vmem, size = 0x2000, scoped, tag = 'output window, operand 1, single buffered']
    #allocation19 [shape = 's32[1]{0}', space=sflag, size = 0x4, scoped, tag = 'scoped memory for tpu_custom_call.1']
    %17 = vsyncpa [#allocation4], 0
    %18 = vsyncpa [#allocation7], 0
    %19 = vsyncpa [#allocation10], 0
    %20 = vsyncpa [#allocation13], 0
    %21 = vsyncpa [#allocation16], 0
    %22 = vsyncpa [#allocation5], 0
    %23 = vsyncpa [#allocation19], 0
    // Predicated region
    $region2: #{tpu_custom_call.1} parent=1 // pred_check
      _
    $region3: #{tpu_custom_call.1} parent=1 // pred_check_branch
      %25 = sbr.rel (0) target = $region5
    $region4: #{tpu_custom_call.1} parent=1 // pred_region
      _
    $region5: #{tpu_custom_call.1} parent=1 // pred_fallthru
      _
    // Predicated region
    $region6: #{tpu_custom_call.1} parent=1 // pred_check
      _
    $region7: #{tpu_custom_call.1} parent=1 // pred_check_branch
      %27 = sbr.rel (0) target = $region9
    $region8: #{tpu_custom_call.1} parent=1 // pred_region
      %s29 = ssub.s32 128, 128
      %30 = vsyncadd [#allocation4], %s29
      %s31 = sshll.u32 [#allocation3], 4
      %s32 = int_to_ptr.vmem [resolvable:$true] %s31
      %37 = dma.hbm_to_vmem [thread:$0]  %s1, 128, %s32, [#allocation4], 64, 64, 4
    $region9: #{tpu_custom_call.1} parent=1 // pred_fallthru
      _
    // Predicated region
    $region10: #{tpu_custom_call.1} parent=1 // pred_check
      _
    $region11: #{tpu_custom_call.1} parent=1 // pred_check_branch
      %39 = sbr.rel (0) target = $region13
    $region12: #{tpu_custom_call.1} parent=1 // pred_region
      %s41 = ssub.s32 1024, 1024
      %42 = vsyncadd [#allocation7], %s41
      %s43 = sshll.u32 [#allocation6], 4
      %s44 = int_to_ptr.vmem [resolvable:$true] %s43
      %49 = dma.hbm_to_vmem [thread:$0]  %s2, 1024, %s44, [#allocation7], 64, 64, 4
    $region13: #{tpu_custom_call.1} parent=1 // pred_fallthru
      _
    // Predicated region
    $region14: #{tpu_custom_call.1} parent=1 // pred_check
      _
    $region15: #{tpu_custom_call.1} parent=1 // pred_check_branch
      %51 = sbr.rel (0) target = $region17
    $region16: #{tpu_custom_call.1} parent=1 // pred_region
      %s53 = ssub.s32 1024, 1024
      %54 = vsyncadd [#allocation7], %s53
      %s55 = sshll.u32 [#allocation8], 4
      %s56 = int_to_ptr.vmem [resolvable:$true] %s55
      %61 = dma.hbm_to_vmem [thread:$0]  %s3, 1024, %s56, [#allocation7], 64, 64, 4
    $region17: #{tpu_custom_call.1} parent=1 // pred_fallthru
      _
    // Predicated region
    $region18: #{tpu_custom_call.1} parent=1 // pred_check
      _
    $region19: #{tpu_custom_call.1} parent=1 // pred_check_branch
      %63 = sbr.rel (0) target = $region21
    $region20: #{tpu_custom_call.1} parent=1 // pred_region
      %s65 = ssub.s32 1024, 1024
      %66 = vsyncadd [#allocation10], %s65
      %s67 = sshll.u32 [#allocation9], 4
      %s68 = int_to_ptr.vmem [resolvable:$true] %s67
      %73 = dma.hbm_to_vmem [thread:$0]  %s4, 1024, %s68, [#allocation10], 64, 64, 4
    $region21: #{tpu_custom_call.1} parent=1 // pred_fallthru
      _
    // Predicated region
    $region22: #{tpu_custom_call.1} parent=1 // pred_check
      _
    $region23: #{tpu_custom_call.1} parent=1 // pred_check_branch
      %75 = sbr.rel (0) target = $region25
    $region24: #{tpu_custom_call.1} parent=1 // pred_region
      %s77 = ssub.s32 1024, 1024
      %78 = vsyncadd [#allocation10], %s77
      %s79 = sshll.u32 [#allocation11], 4
      %s80 = int_to_ptr.vmem [resolvable:$true] %s79
      %85 = dma.hbm_to_vmem [thread:$0]  %s5, 1024, %s80, [#allocation10], 64, 64, 4
    $region25: #{tpu_custom_call.1} parent=1 // pred_fallthru
      _
    // Predicated region
    $region26: #{tpu_custom_call.1} parent=1 // pred_check
      _
    $region27: #{tpu_custom_call.1} parent=1 // pred_check_branch
      %87 = sbr.rel (0) target = $region29
    $region28: #{tpu_custom_call.1} parent=1 // pred_region
      %s89 = ssub.s32 1024, 1024
      %90 = vsyncadd [#allocation13], %s89
      %s91 = sshll.u32 [#allocation12], 4
      %s92 = int_to_ptr.vmem [resolvable:$true] %s91
      %97 = dma.hbm_to_vmem [thread:$0]  %s6, 1024, %s92, [#allocation13], 64, 64, 4
    $region29: #{tpu_custom_call.1} parent=1 // pred_fallthru
      _
    // Predicated region
    $region30: #{tpu_custom_call.1} parent=1 // pred_check
      _
    $region31: #{tpu_custom_call.1} parent=1 // pred_check_branch
      %99 = sbr.rel (0) target = $region33
    $region32: #{tpu_custom_call.1} parent=1 // pred_region
      %s101 = ssub.s32 1024, 1024
      %102 = vsyncadd [#allocation13], %s101
      %s103 = sshll.u32 [#allocation14], 4
      %s104 = int_to_ptr.vmem [resolvable:$true] %s103
      %109 = dma.hbm_to_vmem [thread:$0]  %s7, 1024, %s104, [#allocation13], 64, 64, 4
    $region33: #{tpu_custom_call.1} parent=1 // pred_fallthru
      _
    // Predicated region
    $region34: #{tpu_custom_call.1} parent=1 // pred_check
      _
    $region35: #{tpu_custom_call.1} parent=1 // pred_check_branch
      %111 = sbr.rel (0) target = $region37
    $region36: #{tpu_custom_call.1} parent=1 // pred_region
      %s113 = ssub.s32 1024, 1024
      %114 = vsyncadd [#allocation16], %s113
      %s115 = sshll.u32 [#allocation15], 4
      %s116 = int_to_ptr.vmem [resolvable:$true] %s115
      %121 = dma.hbm_to_vmem [thread:$0]  %s8, 1024, %s116, [#allocation16], 64, 64, 4
    $region37: #{tpu_custom_call.1} parent=1 // pred_fallthru
      _
    // Predicated region
    $region38: #{tpu_custom_call.1} parent=1 // pred_check
      _
    $region39: #{tpu_custom_call.1} parent=1 // pred_check_branch
      %123 = sbr.rel (0) target = $region41
    $region40: #{tpu_custom_call.1} parent=1 // pred_region
      %124 = dma.done [#allocation4], 128
    $region41: #{tpu_custom_call.1} parent=1 // pred_fallthru
      _
    // Predicated region
    $region42: #{tpu_custom_call.1} parent=1 // pred_check
      _
    $region43: #{tpu_custom_call.1} parent=1 // pred_check_branch
      %126 = sbr.rel (0) target = $region45
    $region44: #{tpu_custom_call.1} parent=1 // pred_region
      %127 = dma.done [#allocation7], 1024
    $region45: #{tpu_custom_call.1} parent=1 // pred_fallthru
      _
    // Predicated region
    $region46: #{tpu_custom_call.1} parent=1 // pred_check
      _
    $region47: #{tpu_custom_call.1} parent=1 // pred_check_branch
      %129 = sbr.rel (0) target = $region49
    $region48: #{tpu_custom_call.1} parent=1 // pred_region
      %130 = dma.done [#allocation7], 1024
    $region49: #{tpu_custom_call.1} parent=1 // pred_fallthru
      _
    // Predicated region
    $region50: #{tpu_custom_call.1} parent=1 // pred_check
      _
    $region51: #{tpu_custom_call.1} parent=1 // pred_check_branch
      %132 = sbr.rel (0) target = $region53
    $region52: #{tpu_custom_call.1} parent=1 // pred_region
      %133 = dma.done [#allocation10], 1024
    $region53: #{tpu_custom_call.1} parent=1 // pred_fallthru
      _
    // Predicated region
    $region54: #{tpu_custom_call.1} parent=1 // pred_check
      _
    $region55: #{tpu_custom_call.1} parent=1 // pred_check_branch
      %135 = sbr.rel (0) target = $region57
    $region56: #{tpu_custom_call.1} parent=1 // pred_region
      %136 = dma.done [#allocation10], 1024
    $region57: #{tpu_custom_call.1} parent=1 // pred_fallthru
      _
    // Predicated region
    $region58: #{tpu_custom_call.1} parent=1 // pred_check
      _
    $region59: #{tpu_custom_call.1} parent=1 // pred_check_branch
      %138 = sbr.rel (0) target = $region61
    $region60: #{tpu_custom_call.1} parent=1 // pred_region
      %139 = dma.done [#allocation13], 1024
    $region61: #{tpu_custom_call.1} parent=1 // pred_fallthru
      _
    // Predicated region
    $region62: #{tpu_custom_call.1} parent=1 // pred_check
      _
    $region63: #{tpu_custom_call.1} parent=1 // pred_check_branch
      %141 = sbr.rel (0) target = $region65
    $region64: #{tpu_custom_call.1} parent=1 // pred_region
      %142 = dma.done [#allocation13], 1024
    $region65: #{tpu_custom_call.1} parent=1 // pred_fallthru
      _
    // Predicated region
    $region66: #{tpu_custom_call.1} parent=1 // pred_check
      _
    $region67: #{tpu_custom_call.1} parent=1 // pred_check_branch
      %144 = sbr.rel (0) target = $region69
    $region68: #{tpu_custom_call.1} parent=1 // pred_region
      %145 = dma.done [#allocation16], 1024
    $region69: #{tpu_custom_call.1} parent=1 // pred_fallthru
      _
    %v147 = vld [vmem:[#allocation3] sm:$0xf]
    %v148 = vld [vmem:[#allocation3 + $0x4] sm:$0xf]
    %v149 = vld [vmem:[#allocation8] sm:$0xf]
    %v150 = vld [vmem:[#allocation8 + $0x4] sm:$0xf]
    %v151 = vld [vmem:[#allocation8 + $0x8] sm:$0xf]
    %v152 = vld [vmem:[#allocation8 + $0xc] sm:$0xf]
    %v153 = vld [vmem:[#allocation8 + $0x10] sm:$0xf]
    %v154 = vld [vmem:[#allocation8 + $0x14] sm:$0xf]
    %v155 = vld [vmem:[#allocation8 + $0x18] sm:$0xf]
    %v156 = vld [vmem:[#allocation8 + $0x1c] sm:$0xf]
    %v157 = vld [vmem:[#allocation8 + $0x20] sm:$0xf]
    %v158 = vld [vmem:[#allocation8 + $0x24] sm:$0xf]
    %v159 = vld [vmem:[#allocation8 + $0x28] sm:$0xf]
    %v160 = vld [vmem:[#allocation8 + $0x2c] sm:$0xf]
    %v161 = vld [vmem:[#allocation8 + $0x30] sm:$0xf]
    %v162 = vld [vmem:[#allocation8 + $0x34] sm:$0xf]
    %v163 = vld [vmem:[#allocation8 + $0x38] sm:$0xf]
    %v164 = vld [vmem:[#allocation8 + $0x3c] sm:$0xf]
    %v165 = vld [vmem:[#allocation9] sm:$0xf]
    %v166 = vld [vmem:[#allocation9 + $0x4] sm:$0xf]
    %v167 = vld [vmem:[#allocation9 + $0x8] sm:$0xf]
    %v168 = vld [vmem:[#allocation9 + $0xc] sm:$0xf]
    %v169 = vld [vmem:[#allocation9 + $0x10] sm:$0xf]
    %v170 = vld [vmem:[#allocation9 + $0x14] sm:$0xf]
    %v171 = vld [vmem:[#allocation9 + $0x18] sm:$0xf]
    %v172 = vld [vmem:[#allocation9 + $0x1c] sm:$0xf]
    %v173 = vld [vmem:[#allocation9 + $0x20] sm:$0xf]
    %v174 = vld [vmem:[#allocation9 + $0x24] sm:$0xf]
    %v175 = vld [vmem:[#allocation9 + $0x28] sm:$0xf]
    %v176 = vld [vmem:[#allocation9 + $0x2c] sm:$0xf]
    %v177 = vld [vmem:[#allocation9 + $0x30] sm:$0xf]
    %v178 = vld [vmem:[#allocation9 + $0x34] sm:$0xf]
    %v179 = vld [vmem:[#allocation9 + $0x38] sm:$0xf]
    %v180 = vld [vmem:[#allocation9 + $0x3c] sm:$0xf]
    %v183 = vunpack.c.l.b16 %v147
    %v184 = vunpack.c.l.b16 %v148
    %v185 = vpack.c.b16 %v184, %v183
    %v203 = vunpack.c.l.b16 %v165
    %v204 = vunpack.c.l.b16 %v166
    %v205 = vunpack.c.l.b16 %v167
    %v206 = vunpack.c.l.b16 %v168
    %v207 = vunpack.c.l.b16 %v169
    %v208 = vunpack.c.l.b16 %v170
    %v209 = vunpack.c.l.b16 %v171
    %v210 = vunpack.c.l.b16 %v172
    %v211 = vunpack.c.l.b16 %v173
    %v212 = vunpack.c.l.b16 %v174
    %v213 = vunpack.c.l.b16 %v175
    %v214 = vunpack.c.l.b16 %v176
    %v215 = vunpack.c.l.b16 %v177
    %v216 = vunpack.c.l.b16 %v178
    %v217 = vunpack.c.l.b16 %v179
    %v218 = vunpack.c.l.b16 %v180
    %v219 = vpack.c.b16 %v204, %v203
    %v220 = vpack.c.b16 %v206, %v205
    %v221 = vpack.c.b16 %v208, %v207
    %v222 = vpack.c.b16 %v210, %v209
    %v223 = vpack.c.b16 %v212, %v211
    %v224 = vpack.c.b16 %v214, %v213
    %v225 = vpack.c.b16 %v216, %v215
    %v226 = vpack.c.b16 %v218, %v217
    %235 = vmatprep.subr.bf16.mxu0 0
    %236 = vmatpush1.bf16.xpose.msra.mxu0 %v219
    %237 = vmatprep.subr.bf16.mxu0 0
    %238 = vmatpush1.bf16.xpose.msra.mxu0 %v220
    %239 = vmatprep.subr.bf16.mxu0 0
    %240 = vmatpush1.bf16.xpose.msra.mxu0 %v221
    %241 = vmatprep.subr.bf16.mxu0 0
    %242 = vmatpush1.bf16.xpose.msra.mxu0 %v222
    %243 = vmatprep.subr.bf16.mxu0 0
    %244 = vmatpush1.bf16.xpose.msra.mxu0 %v223
    %245 = vmatprep.subr.bf16.mxu0 0
    %246 = vmatpush1.bf16.xpose.msra.mxu0 %v224
    %247 = vmatprep.subr.bf16.mxu0 0
    %248 = vmatpush1.bf16.xpose.msra.mxu0 %v225
    %249 = vmatprep.subr.bf16.mxu0 0
    %250 = vmatpush1.bf16.xpose.msra.mxu0 %v226
    %251 = vmatprep.subr.bf16.mxu0 0
    %252 = vmatpush1.bf16.xpose.msra.mxu0 0
    %253 = vmatprep.subr.bf16.mxu0 0
    %254 = vmatpush1.bf16.xpose.msra.mxu0 0
    %255 = vmatprep.subr.bf16.mxu0 0
    %256 = vmatpush1.bf16.xpose.msra.mxu0 0
    %257 = vmatprep.subr.bf16.mxu0 0
    %258 = vmatpush1.bf16.xpose.msra.mxu0 0
    %259 = vmatprep.subr.bf16.mxu0 0
    %260 = vmatpush1.bf16.xpose.msra.mxu0 0
    %261 = vmatprep.subr.bf16.mxu0 0
    %262 = vmatpush1.bf16.xpose.msra.mxu0 0
    %263 = vmatprep.subr.bf16.mxu0 0
    %264 = vmatpush1.bf16.xpose.msra.mxu0 0
    %265 = vmatprep.subr.bf16.mxu0 0
    %266 = vmatpush1.bf16.xpose.msra.mxu0 0
    %267 = vmatprep.mubr.bf16.mxu0 0
    %268 = vmatmul.mubr.bf16.gmra.mrb[0].mxu0 %v185
    %v269 = vpop.f32.mrb[0].mxu0
    %v270 = vadd.f32 0.0, %v269
    %v271 = vpop.f32.mrb[0].mxu0
    %v272 = vpop.f32.mrb[0].mxu0
    %v273 = vadd.f32 0.0, %v272
    %v274 = vpop.f32.mrb[0].mxu0
    %275 = vdwg.mxu0
    %v276 = vpack.c.bf16 %v273, %v270
    %v277 = vld [vmem:[#allocation11] sm:$0xf]
    %v278 = vld [vmem:[#allocation11 + $0x4] sm:$0xf]
    %v279 = vld [vmem:[#allocation11 + $0x8] sm:$0xf]
    %v280 = vld [vmem:[#allocation11 + $0xc] sm:$0xf]
    %v281 = vld [vmem:[#allocation11 + $0x10] sm:$0xf]
    %v282 = vld [vmem:[#allocation11 + $0x14] sm:$0xf]
    %v283 = vld [vmem:[#allocation11 + $0x18] sm:$0xf]
    %v284 = vld [vmem:[#allocation11 + $0x1c] sm:$0xf]
    %v285 = vld [vmem:[#allocation11 + $0x20] sm:$0xf]
    %v286 = vld [vmem:[#allocation11 + $0x24] sm:$0xf]
    %v287 = vld [vmem:[#allocation11 + $0x28] sm:$0xf]
    %v288 = vld [vmem:[#allocation11 + $0x2c] sm:$0xf]
    %v289 = vld [vmem:[#allocation11 + $0x30] sm:$0xf]
    %v290 = vld [vmem:[#allocation11 + $0x34] sm:$0xf]
    %v291 = vld [vmem:[#allocation11 + $0x38] sm:$0xf]
    %v292 = vld [vmem:[#allocation11 + $0x3c] sm:$0xf]
    %v309 = vunpack.c.l.b16 %v277
    %v310 = vunpack.c.l.b16 %v278
    %v311 = vunpack.c.l.b16 %v279
    %v312 = vunpack.c.l.b16 %v280
    %v313 = vunpack.c.l.b16 %v281
    %v314 = vunpack.c.l.b16 %v282
    %v315 = vunpack.c.l.b16 %v283
    %v316 = vunpack.c.l.b16 %v284
    %v317 = vunpack.c.l.b16 %v285
    %v318 = vunpack.c.l.b16 %v286
    %v319 = vunpack.c.l.b16 %v287
    %v320 = vunpack.c.l.b16 %v288
    %v321 = vunpack.c.l.b16 %v289
    %v322 = vunpack.c.l.b16 %v290
    %v323 = vunpack.c.l.b16 %v291
    %v324 = vunpack.c.l.b16 %v292
    %v325 = vpack.c.b16 %v310, %v309
    %v326 = vpack.c.b16 %v312, %v311
    %v327 = vpack.c.b16 %v314, %v313
    %v328 = vpack.c.b16 %v316, %v315
    %v329 = vpack.c.b16 %v318, %v317
    %v330 = vpack.c.b16 %v320, %v319
    %v331 = vpack.c.b16 %v322, %v321
    %v332 = vpack.c.b16 %v324, %v323
    %341 = vmatprep.subr.bf16.mxu0 0
    %342 = vmatpush1.bf16.xpose.msra.mxu0 %v325
    %343 = vmatprep.subr.bf16.mxu0 0
    %344 = vmatpush1.bf16.xpose.msra.mxu0 %v326
    %345 = vmatprep.subr.bf16.mxu0 0
    %346 = vmatpush1.bf16.xpose.msra.mxu0 %v327
    %347 = vmatprep.subr.bf16.mxu0 0
    %348 = vmatpush1.bf16.xpose.msra.mxu0 %v328
    %349 = vmatprep.subr.bf16.mxu0 0
    %350 = vmatpush1.bf16.xpose.msra.mxu0 %v329
    %351 = vmatprep.subr.bf16.mxu0 0
    %352 = vmatpush1.bf16.xpose.msra.mxu0 %v330
    %353 = vmatprep.subr.bf16.mxu0 0
    %354 = vmatpush1.bf16.xpose.msra.mxu0 %v331
    %355 = vmatprep.subr.bf16.mxu0 0
    %356 = vmatpush1.bf16.xpose.msra.mxu0 %v332
    %357 = vmatprep.subr.bf16.mxu0 0
    %358 = vmatpush1.bf16.xpose.msra.mxu0 0
    %359 = vmatprep.subr.bf16.mxu0 0
    %360 = vmatpush1.bf16.xpose.msra.mxu0 0
    %361 = vmatprep.subr.bf16.mxu0 0
    %362 = vmatpush1.bf16.xpose.msra.mxu0 0
    %363 = vmatprep.subr.bf16.mxu0 0
    %364 = vmatpush1.bf16.xpose.msra.mxu0 0
    %365 = vmatprep.subr.bf16.mxu0 0
    %366 = vmatpush1.bf16.xpose.msra.mxu0 0
    %367 = vmatprep.subr.bf16.mxu0 0
    %368 = vmatpush1.bf16.xpose.msra.mxu0 0
    %369 = vmatprep.subr.bf16.mxu0 0
    %370 = vmatpush1.bf16.xpose.msra.mxu0 0
    %371 = vmatprep.subr.bf16.mxu0 0
    %372 = vmatpush1.bf16.xpose.msra.mxu0 0
    %373 = vmatprep.mubr.bf16.mxu0 0
    %374 = vmatmul.mubr.bf16.gmra.mrb[0].mxu0 %v276
    %v375 = vpop.f32.mrb[0].mxu0
    %v376 = vadd.f32 0.0, %v375
    %v377 = vpop.f32.mrb[0].mxu0
    %v378 = vpop.f32.mrb[0].mxu0
    %v379 = vadd.f32 0.0, %v378
    %v380 = vpop.f32.mrb[0].mxu0
    %381 = vdwg.mxu0
    %v398 = vunpack.c.l.b16 %v149
    %v399 = vunpack.c.l.b16 %v150
    %v400 = vunpack.c.l.b16 %v151
    %v401 = vunpack.c.l.b16 %v152
    %v402 = vunpack.c.l.b16 %v153
    %v403 = vunpack.c.l.b16 %v154
    %v404 = vunpack.c.l.b16 %v155
    %v405 = vunpack.c.l.b16 %v156
    %v406 = vunpack.c.l.b16 %v157
    %v407 = vunpack.c.l.b16 %v158
    %v408 = vunpack.c.l.b16 %v159
    %v409 = vunpack.c.l.b16 %v160
    %v410 = vunpack.c.l.b16 %v161
    %v411 = vunpack.c.l.b16 %v162
    %v412 = vunpack.c.l.b16 %v163
    %v413 = vunpack.c.l.b16 %v164
    %v414 = vpack.c.b16 %v399, %v398
    %v415 = vpack.c.b16 %v401, %v400
    %v416 = vpack.c.b16 %v403, %v402
    %v417 = vpack.c.b16 %v405, %v404
    %v418 = vpack.c.b16 %v407, %v406
    %v419 = vpack.c.b16 %v409, %v408
    %v420 = vpack.c.b16 %v411, %v410
    %v421 = vpack.c.b16 %v413, %v412
    %430 = vmatprep.subr.bf16.mxu0 0
    %431 = vmatpush1.bf16.xpose.msra.mxu0 %v414
    %432 = vmatprep.subr.bf16.mxu0 0
    %433 = vmatpush1.bf16.xpose.msra.mxu0 %v415
    %434 = vmatprep.subr.bf16.mxu0 0
    %435 = vmatpush1.bf16.xpose.msra.mxu0 %v416
    %436 = vmatprep.subr.bf16.mxu0 0
    %437 = vmatpush1.bf16.xpose.msra.mxu0 %v417
    %438 = vmatprep.subr.bf16.mxu0 0
    %439 = vmatpush1.bf16.xpose.msra.mxu0 %v418
    %440 = vmatprep.subr.bf16.mxu0 0
    %441 = vmatpush1.bf16.xpose.msra.mxu0 %v419
    %442 = vmatprep.subr.bf16.mxu0 0
    %443 = vmatpush1.bf16.xpose.msra.mxu0 %v420
    %444 = vmatprep.subr.bf16.mxu0 0
    %445 = vmatpush1.bf16.xpose.msra.mxu0 %v421
    %446 = vmatprep.subr.bf16.mxu0 0
    %447 = vmatpush1.bf16.xpose.msra.mxu0 0
    %448 = vmatprep.subr.bf16.mxu0 0
    %449 = vmatpush1.bf16.xpose.msra.mxu0 0
    %450 = vmatprep.subr.bf16.mxu0 0
    %451 = vmatpush1.bf16.xpose.msra.mxu0 0
    %452 = vmatprep.subr.bf16.mxu0 0
    %453 = vmatpush1.bf16.xpose.msra.mxu0 0
    %454 = vmatprep.subr.bf16.mxu0 0
    %455 = vmatpush1.bf16.xpose.msra.mxu0 0
    %456 = vmatprep.subr.bf16.mxu0 0
    %457 = vmatpush1.bf16.xpose.msra.mxu0 0
    %458 = vmatprep.subr.bf16.mxu0 0
    %459 = vmatpush1.bf16.xpose.msra.mxu0 0
    %460 = vmatprep.subr.bf16.mxu0 0
    %461 = vmatpush1.bf16.xpose.msra.mxu0 0
    %462 = vmatprep.mubr.bf16.mxu0 0
    %463 = vmatmul.mubr.bf16.gmra.mrb[0].mxu0 %v185
    %v464 = vpop.f32.mrb[0].mxu0
    %v465 = vadd.f32 %v376, %v464
    %v466 = vpop.f32.mrb[0].mxu0
    %v467 = vpop.f32.mrb[0].mxu0
    %v468 = vadd.f32 %v379, %v467
    %v469 = vpop.f32.mrb[0].mxu0
    %470 = vdwg.mxu0
    %v471 = vld [vmem:[#allocation6] sm:$0xf]
    %v472 = vld [vmem:[#allocation6 + $0x4] sm:$0xf]
    %v473 = vld [vmem:[#allocation6 + $0x8] sm:$0xf]
    %v474 = vld [vmem:[#allocation6 + $0xc] sm:$0xf]
    %v475 = vld [vmem:[#allocation6 + $0x10] sm:$0xf]
    %v476 = vld [vmem:[#allocation6 + $0x14] sm:$0xf]
    %v477 = vld [vmem:[#allocation6 + $0x18] sm:$0xf]
    %v478 = vld [vmem:[#allocation6 + $0x1c] sm:$0xf]
    %v479 = vld [vmem:[#allocation6 + $0x20] sm:$0xf]
    %v480 = vld [vmem:[#allocation6 + $0x24] sm:$0xf]
    %v481 = vld [vmem:[#allocation6 + $0x28] sm:$0xf]
    %v482 = vld [vmem:[#allocation6 + $0x2c] sm:$0xf]
    %v483 = vld [vmem:[#allocation6 + $0x30] sm:$0xf]
    %v484 = vld [vmem:[#allocation6 + $0x34] sm:$0xf]
    %v485 = vld [vmem:[#allocation6 + $0x38] sm:$0xf]
    %v486 = vld [vmem:[#allocation6 + $0x3c] sm:$0xf]
    %v487 = vld [vmem:[#allocation12] sm:$0xf]
    %v488 = vld [vmem:[#allocation12 + $0x4] sm:$0xf]
    %v489 = vld [vmem:[#allocation12 + $0x8] sm:$0xf]
    %v490 = vld [vmem:[#allocation12 + $0xc] sm:$0xf]
    %v491 = vld [vmem:[#allocation12 + $0x10] sm:$0xf]
    %v492 = vld [vmem:[#allocation12 + $0x14] sm:$0xf]
    %v493 = vld [vmem:[#allocation12 + $0x18] sm:$0xf]
    %v494 = vld [vmem:[#allocation12 + $0x1c] sm:$0xf]
    %v495 = vld [vmem:[#allocation12 + $0x20] sm:$0xf]
    %v496 = vld [vmem:[#allocation12 + $0x24] sm:$0xf]
    %v497 = vld [vmem:[#allocation12 + $0x28] sm:$0xf]
    %v498 = vld [vmem:[#allocation12 + $0x2c] sm:$0xf]
    %v499 = vld [vmem:[#allocation12 + $0x30] sm:$0xf]
    %v500 = vld [vmem:[#allocation12 + $0x34] sm:$0xf]
    %v501 = vld [vmem:[#allocation12 + $0x38] sm:$0xf]
    %v502 = vld [vmem:[#allocation12 + $0x3c] sm:$0xf]
    %v519 = vunpack.c.l.b16 %v471
    %v520 = vunpack.c.l.b16 %v472
    %v521 = vunpack.c.l.b16 %v473
    %v522 = vunpack.c.l.b16 %v474
    %v523 = vunpack.c.l.b16 %v475
    %v524 = vunpack.c.l.b16 %v476
    %v525 = vunpack.c.l.b16 %v477
    %v526 = vunpack.c.l.b16 %v478
    %v527 = vunpack.c.l.b16 %v479
    %v528 = vunpack.c.l.b16 %v480
    %v529 = vunpack.c.l.b16 %v481
    %v530 = vunpack.c.l.b16 %v482
    %v531 = vunpack.c.l.b16 %v483
    %v532 = vunpack.c.l.b16 %v484
    %v533 = vunpack.c.l.b16 %v485
    %v534 = vunpack.c.l.b16 %v486
    %v535 = vpack.c.b16 %v520, %v519
    %v536 = vpack.c.b16 %v522, %v521
    %v537 = vpack.c.b16 %v524, %v523
    %v538 = vpack.c.b16 %v526, %v525
    %v539 = vpack.c.b16 %v528, %v527
    %v540 = vpack.c.b16 %v530, %v529
    %v541 = vpack.c.b16 %v532, %v531
    %v542 = vpack.c.b16 %v534, %v533
    %v567 = vunpack.c.l.b16 %v487
    %v568 = vunpack.c.l.b16 %v488
    %v569 = vunpack.c.l.b16 %v489
    %v570 = vunpack.c.l.b16 %v490
    %v571 = vunpack.c.l.b16 %v491
    %v572 = vunpack.c.l.b16 %v492
    %v573 = vunpack.c.l.b16 %v493
    %v574 = vunpack.c.l.b16 %v494
    %v575 = vunpack.c.l.b16 %v495
    %v576 = vunpack.c.l.b16 %v496
    %v577 = vunpack.c.l.b16 %v497
    %v578 = vunpack.c.l.b16 %v498
    %v579 = vunpack.c.l.b16 %v499
    %v580 = vunpack.c.l.b16 %v500
    %v581 = vunpack.c.l.b16 %v501
    %v582 = vunpack.c.l.b16 %v502
    %v583 = vpack.c.b16 %v568, %v567
    %v584 = vpack.c.b16 %v570, %v569
    %v585 = vpack.c.b16 %v572, %v571
    %v586 = vpack.c.b16 %v574, %v573
    %v587 = vpack.c.b16 %v576, %v575
    %v588 = vpack.c.b16 %v578, %v577
    %v589 = vpack.c.b16 %v580, %v579
    %v590 = vpack.c.b16 %v582, %v581
    %599 = vmatprep.subr.bf16.mxu0 0
    %600 = vmatpush1.bf16.xpose.msra.mxu0 %v583
    %601 = vmatprep.subr.bf16.mxu0 0
    %602 = vmatpush1.bf16.xpose.msra.mxu0 %v584
    %603 = vmatprep.subr.bf16.mxu0 0
    %604 = vmatpush1.bf16.xpose.msra.mxu0 %v585
    %605 = vmatprep.subr.bf16.mxu0 0
    %606 = vmatpush1.bf16.xpose.msra.mxu0 %v586
    %607 = vmatprep.subr.bf16.mxu0 0
    %608 = vmatpush1.bf16.xpose.msra.mxu0 %v587
    %609 = vmatprep.subr.bf16.mxu0 0
    %610 = vmatpush1.bf16.xpose.msra.mxu0 %v588
    %611 = vmatprep.subr.bf16.mxu0 0
    %612 = vmatpush1.bf16.xpose.msra.mxu0 %v589
    %613 = vmatprep.subr.bf16.mxu0 0
    %614 = vmatpush1.bf16.xpose.msra.mxu0 %v590
    %615 = vmatprep.subr.bf16.mxu0 0
    %616 = vmatpush1.bf16.xpose.msra.mxu0 0
    %617 = vmatprep.subr.bf16.mxu0 0
    %618 = vmatpush1.bf16.xpose.msra.mxu0 0
    %619 = vmatprep.subr.bf16.mxu0 0
    %620 = vmatpush1.bf16.xpose.msra.mxu0 0
    %621 = vmatprep.subr.bf16.mxu0 0
    %622 = vmatpush1.bf16.xpose.msra.mxu0 0
    %623 = vmatprep.subr.bf16.mxu0 0
    %624 = vmatpush1.bf16.xpose.msra.mxu0 0
    %625 = vmatprep.subr.bf16.mxu0 0
    %626 = vmatpush1.bf16.xpose.msra.mxu0 0
    %627 = vmatprep.subr.bf16.mxu0 0
    %628 = vmatpush1.bf16.xpose.msra.mxu0 0
    %629 = vmatprep.subr.bf16.mxu0 0
    %630 = vmatpush1.bf16.xpose.msra.mxu0 0
    %631 = vmatprep.mubr.bf16.mxu0 0
    %632 = vmatmul.mubr.bf16.gmra.mrb[0].mxu0 %v535
    %v633 = vpop.f32.mrb[0].mxu0
    %v634 = vadd.f32 0.0, %v633
    %v635 = vpop.f32.mrb[0].mxu0
    %v636 = vpop.f32.mrb[0].mxu0
    %v637 = vadd.f32 0.0, %v636
    %v638 = vpop.f32.mrb[0].mxu0
    %639 = vmatprep.mubr.bf16.mxu0 0
    %640 = vmatmul.mubr.bf16.gmra.mrb[0].mxu0 %v536
    %v641 = vpop.f32.mrb[0].mxu0
    %v642 = vadd.f32 0.0, %v641
    %v643 = vpop.f32.mrb[0].mxu0
    %v644 = vpop.f32.mrb[0].mxu0
    %v645 = vadd.f32 0.0, %v644
    %v646 = vpop.f32.mrb[0].mxu0
    %647 = vmatprep.mubr.bf16.mxu0 0
    %648 = vmatmul.mubr.bf16.gmra.mrb[0].mxu0 %v537
    %v649 = vpop.f32.mrb[0].mxu0
    %v650 = vadd.f32 0.0, %v649
    %v651 = vpop.f32.mrb[0].mxu0
    %v652 = vpop.f32.mrb[0].mxu0
    %v653 = vadd.f32 0.0, %v652
    %v654 = vpop.f32.mrb[0].mxu0
    %655 = vmatprep.mubr.bf16.mxu0 0
    %656 = vmatmul.mubr.bf16.gmra.mrb[0].mxu0 %v538
    %v657 = vpop.f32.mrb[0].mxu0
    %v658 = vadd.f32 0.0, %v657
    %v659 = vpop.f32.mrb[0].mxu0
    %v660 = vpop.f32.mrb[0].mxu0
    %v661 = vadd.f32 0.0, %v660
    %v662 = vpop.f32.mrb[0].mxu0
    %663 = vmatprep.mubr.bf16.mxu0 0
    %664 = vmatmul.mubr.bf16.gmra.mrb[0].mxu0 %v539
    %v665 = vpop.f32.mrb[0].mxu0
    %v666 = vadd.f32 0.0, %v665
    %v667 = vpop.f32.mrb[0].mxu0
    %v668 = vpop.f32.mrb[0].mxu0
    %v669 = vadd.f32 0.0, %v668
    %v670 = vpop.f32.mrb[0].mxu0
    %671 = vmatprep.mubr.bf16.mxu0 0
    %672 = vmatmul.mubr.bf16.gmra.mrb[0].mxu0 %v540
    %v673 = vpop.f32.mrb[0].mxu0
    %v674 = vadd.f32 0.0, %v673
    %v675 = vpop.f32.mrb[0].mxu0
    %v676 = vpop.f32.mrb[0].mxu0
    %v677 = vadd.f32 0.0, %v676
    %v678 = vpop.f32.mrb[0].mxu0
    %679 = vmatprep.mubr.bf16.mxu0 0
    %680 = vmatmul.mubr.bf16.gmra.mrb[0].mxu0 %v541
    %v681 = vpop.f32.mrb[0].mxu0
    %v682 = vadd.f32 0.0, %v681
    %v683 = vpop.f32.mrb[0].mxu0
    %v684 = vpop.f32.mrb[0].mxu0
    %v685 = vadd.f32 0.0, %v684
    %v686 = vpop.f32.mrb[0].mxu0
    %687 = vmatprep.mubr.bf16.mxu0 0
    %688 = vmatmul.mubr.bf16.gmra.mrb[0].mxu0 %v542
    %v689 = vpop.f32.mrb[0].mxu0
    %v690 = vadd.f32 0.0, %v689
    %v691 = vpop.f32.mrb[0].mxu0
    %v692 = vpop.f32.mrb[0].mxu0
    %v693 = vadd.f32 0.0, %v692
    %v694 = vpop.f32.mrb[0].mxu0
    %695 = vdwg.mxu0
    %v696 = vmul.f32 %v465, %v465
    %v697 = vmul.f32 %v468, %v468
    %698 = vadd.xlane.f32.xlu0 %v696
    %v699 = vpop.xlane.xlu0 %698
    %700 = vadd.xlane.f32.xlu0 %v697
    %v701 = vpop.xlane.xlu0 %700
    %v702 = vadd.f32 %v699, 1e-12
    %v703 = vadd.f32 %v701, 1e-12
    %v704 = vrsqrt.pop %v702
    %v705 = vrsqrt.pop %v703
    %v706 = vmul.f32 %v634, %v634
    %v707 = vmul.f32 %v637, %v637
    %v708 = vmul.f32 %v642, %v642
    %v709 = vmul.f32 %v645, %v645
    %v710 = vmul.f32 %v650, %v650
    %v711 = vmul.f32 %v653, %v653
    %v712 = vmul.f32 %v658, %v658
    %v713 = vmul.f32 %v661, %v661
    %v714 = vmul.f32 %v666, %v666
    %v715 = vmul.f32 %v669, %v669
    %v716 = vmul.f32 %v674, %v674
    %v717 = vmul.f32 %v677, %v677
    %v718 = vmul.f32 %v682, %v682
    %v719 = vmul.f32 %v685, %v685
    %v720 = vmul.f32 %v690, %v690
    %v721 = vmul.f32 %v693, %v693
    %722 = vadd.xlane.f32.xlu0 %v706
    %v723 = vpop.xlane.xlu0 %722
    %724 = vadd.xlane.f32.xlu0 %v707
    %v725 = vpop.xlane.xlu0 %724
    %726 = vadd.xlane.f32.xlu0 %v708
    %v727 = vpop.xlane.xlu0 %726
    %728 = vadd.xlane.f32.xlu0 %v709
    %v729 = vpop.xlane.xlu0 %728
    %730 = vadd.xlane.f32.xlu0 %v710
    %v731 = vpop.xlane.xlu0 %730
    %732 = vadd.xlane.f32.xlu0 %v711
    %v733 = vpop.xlane.xlu0 %732
    %734 = vadd.xlane.f32.xlu0 %v712
    %v735 = vpop.xlane.xlu0 %734
    %736 = vadd.xlane.f32.xlu0 %v713
    %v737 = vpop.xlane.xlu0 %736
    %738 = vadd.xlane.f32.xlu0 %v714
    %v739 = vpop.xlane.xlu0 %738
    %740 = vadd.xlane.f32.xlu0 %v715
    %v741 = vpop.xlane.xlu0 %740
    %742 = vadd.xlane.f32.xlu0 %v716
    %v743 = vpop.xlane.xlu0 %742
    %744 = vadd.xlane.f32.xlu0 %v717
    %v745 = vpop.xlane.xlu0 %744
    %746 = vadd.xlane.f32.xlu0 %v718
    %v747 = vpop.xlane.xlu0 %746
    %748 = vadd.xlane.f32.xlu0 %v719
    %v749 = vpop.xlane.xlu0 %748
    %750 = vadd.xlane.f32.xlu0 %v720
    %v751 = vpop.xlane.xlu0 %750
    %752 = vadd.xlane.f32.xlu0 %v721
    %v753 = vpop.xlane.xlu0 %752
    %v754 = vadd.f32 %v723, 1e-12
    %v755 = vadd.f32 %v725, 1e-12
    %v756 = vadd.f32 %v727, 1e-12
    %v757 = vadd.f32 %v729, 1e-12
    %v758 = vadd.f32 %v731, 1e-12
    %v759 = vadd.f32 %v733, 1e-12
    %v760 = vadd.f32 %v735, 1e-12
    %v761 = vadd.f32 %v737, 1e-12
    %v762 = vadd.f32 %v739, 1e-12
    %v763 = vadd.f32 %v741, 1e-12
    %v764 = vadd.f32 %v743, 1e-12
    %v765 = vadd.f32 %v745, 1e-12
    %v766 = vadd.f32 %v747, 1e-12
    %v767 = vadd.f32 %v749, 1e-12
    %v768 = vadd.f32 %v751, 1e-12
    %v769 = vadd.f32 %v753, 1e-12
    %v770 = vrsqrt.pop %v754
    %v771 = vrsqrt.pop %v755
    %v772 = vrsqrt.pop %v756
    %v773 = vrsqrt.pop %v757
    %v774 = vrsqrt.pop %v758
    %v775 = vrsqrt.pop %v759
    %v776 = vrsqrt.pop %v760
    %v777 = vrsqrt.pop %v761
    %v778 = vrsqrt.pop %v762
    %v779 = vrsqrt.pop %v763
    %v780 = vrsqrt.pop %v764
    %v781 = vrsqrt.pop %v765
    %v782 = vrsqrt.pop %v766
    %v783 = vrsqrt.pop %v767
    %v784 = vrsqrt.pop %v768
    %v785 = vrsqrt.pop %v769
    %v786 = vmul.f32 %v634, %v770
    %v787 = vmul.f32 %v637, %v771
    %v788 = vmul.f32 %v642, %v772
    %v789 = vmul.f32 %v645, %v773
    %v790 = vmul.f32 %v650, %v774
    %v791 = vmul.f32 %v653, %v775
    %v792 = vmul.f32 %v658, %v776
    %v793 = vmul.f32 %v661, %v777
    %v794 = vmul.f32 %v666, %v778
    %v795 = vmul.f32 %v669, %v779
    %v796 = vmul.f32 %v674, %v780
    %v797 = vmul.f32 %v677, %v781
    %v798 = vmul.f32 %v682, %v782
    %v799 = vmul.f32 %v685, %v783
    %v800 = vmul.f32 %v690, %v784
    %v801 = vmul.f32 %v693, %v785
    %v802 = vpack.c.bf16 %v787, %v786
    %v803 = vpack.c.bf16 %v789, %v788
    %v804 = vpack.c.bf16 %v791, %v790
    %v805 = vpack.c.bf16 %v793, %v792
    %v806 = vpack.c.bf16 %v795, %v794
    %v807 = vpack.c.bf16 %v797, %v796
    %v808 = vpack.c.bf16 %v799, %v798
    %v809 = vpack.c.bf16 %v801, %v800
    %v810 = vpack.c.bf16 %v468, %v465
    %811 = vmatprep.subr.bf16.mxu0 0
    %812 = vmatpush1.bf16.xpose.msra.mxu0 %v802
    %813 = vmatprep.subr.bf16.mxu0 0
    %814 = vmatpush1.bf16.xpose.msra.mxu0 %v803
    %815 = vmatprep.subr.bf16.mxu0 0
    %816 = vmatpush1.bf16.xpose.msra.mxu0 %v804
    %817 = vmatprep.subr.bf16.mxu0 0
    %818 = vmatpush1.bf16.xpose.msra.mxu0 %v805
    %819 = vmatprep.subr.bf16.mxu0 0
    %820 = vmatpush1.bf16.xpose.msra.mxu0 %v806
    %821 = vmatprep.subr.bf16.mxu0 0
    %822 = vmatpush1.bf16.xpose.msra.mxu0 %v807
    %823 = vmatprep.subr.bf16.mxu0 0
    %824 = vmatpush1.bf16.xpose.msra.mxu0 %v808
    %825 = vmatprep.subr.bf16.mxu0 0
    %826 = vmatpush1.bf16.xpose.msra.mxu0 %v809
    %827 = vmatprep.subr.bf16.mxu0 0
    %828 = vmatpush1.bf16.xpose.msra.mxu0 0
    %829 = vmatprep.subr.bf16.mxu0 0
    %830 = vmatpush1.bf16.xpose.msra.mxu0 0
    %831 = vmatprep.subr.bf16.mxu0 0
    %832 = vmatpush1.bf16.xpose.msra.mxu0 0
    %833 = vmatprep.subr.bf16.mxu0 0
    %834 = vmatpush1.bf16.xpose.msra.mxu0 0
    %835 = vmatprep.subr.bf16.mxu0 0
    %836 = vmatpush1.bf16.xpose.msra.mxu0 0
    %837 = vmatprep.subr.bf16.mxu0 0
    %838 = vmatpush1.bf16.xpose.msra.mxu0 0
    %839 = vmatprep.subr.bf16.mxu0 0
    %840 = vmatpush1.bf16.xpose.msra.mxu0 0
    %841 = vmatprep.subr.bf16.mxu0 0
    %842 = vmatpush1.bf16.xpose.msra.mxu0 0
    %843 = vmatprep.mubr.bf16.mxu0 0
    %844 = vmatmul.mubr.bf16.gmra.mrb[0].mxu0 %v810
    %v845 = vpop.f32.mrb[0].mxu0
    %v846 = vadd.f32 0.0, %v845
    %v847 = vpop.f32.mrb[0].mxu0
    %v848 = vpop.f32.mrb[0].mxu0
    %v849 = vadd.f32 0.0, %v848
    %v850 = vpop.f32.mrb[0].mxu0
    %851 = vdwg.mxu0
    %s852 = sld [smem:[#allocation2]]
    %v853 = vstv %s852
    %v854 = vmul.f32 %v853, %v704
    %v855 = vmul.f32 %v853, %v705
    %v856 = vmul.f32 %v846, %v854
    %v857 = vmul.f32 %v849, %v855
    %v858 = vpack.c.bf16 %v857, %v856
    %v859 = vld [vmem:[#allocation14] sm:$0xf]
    %v860 = vld [vmem:[#allocation14 + $0x4] sm:$0xf]
    %v861 = vld [vmem:[#allocation14 + $0x8] sm:$0xf]
    %v862 = vld [vmem:[#allocation14 + $0xc] sm:$0xf]
    %v863 = vld [vmem:[#allocation14 + $0x10] sm:$0xf]
    %v864 = vld [vmem:[#allocation14 + $0x14] sm:$0xf]
    %v865 = vld [vmem:[#allocation14 + $0x18] sm:$0xf]
    %v866 = vld [vmem:[#allocation14 + $0x1c] sm:$0xf]
    %v867 = vld [vmem:[#allocation14 + $0x20] sm:$0xf]
    %v868 = vld [vmem:[#allocation14 + $0x24] sm:$0xf]
    %v869 = vld [vmem:[#allocation14 + $0x28] sm:$0xf]
    %v870 = vld [vmem:[#allocation14 + $0x2c] sm:$0xf]
    %v871 = vld [vmem:[#allocation14 + $0x30] sm:$0xf]
    %v872 = vld [vmem:[#allocation14 + $0x34] sm:$0xf]
    %v873 = vld [vmem:[#allocation14 + $0x38] sm:$0xf]
    %v874 = vld [vmem:[#allocation14 + $0x3c] sm:$0xf]
    %v891 = vunpack.c.l.b16 %v859
    %v892 = vunpack.c.l.b16 %v860
    %v893 = vunpack.c.l.b16 %v861
    %v894 = vunpack.c.l.b16 %v862
    %v895 = vunpack.c.l.b16 %v863
    %v896 = vunpack.c.l.b16 %v864
    %v897 = vunpack.c.l.b16 %v865
    %v898 = vunpack.c.l.b16 %v866
    %v899 = vunpack.c.l.b16 %v867
    %v900 = vunpack.c.l.b16 %v868
    %v901 = vunpack.c.l.b16 %v869
    %v902 = vunpack.c.l.b16 %v870
    %v903 = vunpack.c.l.b16 %v871
    %v904 = vunpack.c.l.b16 %v872
    %v905 = vunpack.c.l.b16 %v873
    %v906 = vunpack.c.l.b16 %v874
    %v907 = vpack.c.b16 %v892, %v891
    %v908 = vpack.c.b16 %v894, %v893
    %v909 = vpack.c.b16 %v896, %v895
    %v910 = vpack.c.b16 %v898, %v897
    %v911 = vpack.c.b16 %v900, %v899
    %v912 = vpack.c.b16 %v902, %v901
    %v913 = vpack.c.b16 %v904, %v903
    %v914 = vpack.c.b16 %v906, %v905
    %923 = vmatprep.subr.bf16.mxu0 0
    %924 = vmatpush1.bf16.xpose.msra.mxu0 %v907
    %925 = vmatprep.subr.bf16.mxu0 0
    %926 = vmatpush1.bf16.xpose.msra.mxu0 %v908
    %927 = vmatprep.subr.bf16.mxu0 0
    %928 = vmatpush1.bf16.xpose.msra.mxu0 %v909
    %929 = vmatprep.subr.bf16.mxu0 0
    %930 = vmatpush1.bf16.xpose.msra.mxu0 %v910
    %931 = vmatprep.subr.bf16.mxu0 0
    %932 = vmatpush1.bf16.xpose.msra.mxu0 %v911
    %933 = vmatprep.subr.bf16.mxu0 0
    %934 = vmatpush1.bf16.xpose.msra.mxu0 %v912
    %935 = vmatprep.subr.bf16.mxu0 0
    %936 = vmatpush1.bf16.xpose.msra.mxu0 %v913
    %937 = vmatprep.subr.bf16.mxu0 0
    %938 = vmatpush1.bf16.xpose.msra.mxu0 %v914
    %939 = vmatprep.subr.bf16.mxu0 0
    %940 = vmatpush1.bf16.xpose.msra.mxu0 0
    %941 = vmatprep.subr.bf16.mxu0 0
    %942 = vmatpush1.bf16.xpose.msra.mxu0 0
    %943 = vmatprep.subr.bf16.mxu0 0
    %944 = vmatpush1.bf16.xpose.msra.mxu0 0
    %945 = vmatprep.subr.bf16.mxu0 0
    %946 = vmatpush1.bf16.xpose.msra.mxu0 0
    %947 = vmatprep.subr.bf16.mxu0 0
    %948 = vmatpush1.bf16.xpose.msra.mxu0 0
    %949 = vmatprep.subr.bf16.mxu0 0
    %950 = vmatpush1.bf16.xpose.msra.mxu0 0
    %951 = vmatprep.subr.bf16.mxu0 0
    %952 = vmatpush1.bf16.xpose.msra.mxu0 0
    %953 = vmatprep.subr.bf16.mxu0 0
    %954 = vmatpush1.bf16.xpose.msra.mxu0 0
    %955 = vmatprep.mubr.bf16.mxu0 0
    %956 = vmatmul.mubr.bf16.gmra.mrb[0].mxu0 %v858
    %v957 = vpop.f32.mrb[0].mxu0
    %v958 = vadd.f32 0.0, %v957
    %v959 = vpop.f32.mrb[0].mxu0
    %v960 = vpop.f32.mrb[0].mxu0
    %v961 = vadd.f32 0.0, %v960
    %v962 = vpop.f32.mrb[0].mxu0
    %963 = vdwg.mxu0
    %964 = vst [vmem:[#allocation17] sm:$0xff] %v958
    %965 = vst [vmem:[#allocation17 + $0x8] sm:$0xff] %v961
    %v966 = vpack.c.bf16 %v961, %v958
    %v967 = vld [vmem:[#allocation15] sm:$0xf]
    %v968 = vld [vmem:[#allocation15 + $0x4] sm:$0xf]
    %v969 = vld [vmem:[#allocation15 + $0x8] sm:$0xf]
    %v970 = vld [vmem:[#allocation15 + $0xc] sm:$0xf]
    %v971 = vld [vmem:[#allocation15 + $0x10] sm:$0xf]
    %v972 = vld [vmem:[#allocation15 + $0x14] sm:$0xf]
    %v973 = vld [vmem:[#allocation15 + $0x18] sm:$0xf]
    %v974 = vld [vmem:[#allocation15 + $0x1c] sm:$0xf]
    %v975 = vld [vmem:[#allocation15 + $0x20] sm:$0xf]
    %v976 = vld [vmem:[#allocation15 + $0x24] sm:$0xf]
    %v977 = vld [vmem:[#allocation15 + $0x28] sm:$0xf]
    %v978 = vld [vmem:[#allocation15 + $0x2c] sm:$0xf]
    %v979 = vld [vmem:[#allocation15 + $0x30] sm:$0xf]
    %v980 = vld [vmem:[#allocation15 + $0x34] sm:$0xf]
    %v981 = vld [vmem:[#allocation15 + $0x38] sm:$0xf]
    %v982 = vld [vmem:[#allocation15 + $0x3c] sm:$0xf]
    %v999 = vunpack.c.l.b16 %v967
    %v1000 = vunpack.c.l.b16 %v968
    %v1001 = vunpack.c.l.b16 %v969
    %v1002 = vunpack.c.l.b16 %v970
    %v1003 = vunpack.c.l.b16 %v971
    %v1004 = vunpack.c.l.b16 %v972
    %v1005 = vunpack.c.l.b16 %v973
    %v1006 = vunpack.c.l.b16 %v974
    %v1007 = vunpack.c.l.b16 %v975
    %v1008 = vunpack.c.l.b16 %v976
    %v1009 = vunpack.c.l.b16 %v977
    %v1010 = vunpack.c.l.b16 %v978
    %v1011 = vunpack.c.l.b16 %v979
    %v1012 = vunpack.c.l.b16 %v980
    %v1013 = vunpack.c.l.b16 %v981
    %v1014 = vunpack.c.l.b16 %v982
    %v1015 = vpack.c.b16 %v1000, %v999
    %v1016 = vpack.c.b16 %v1002, %v1001
    %v1017 = vpack.c.b16 %v1004, %v1003
    %v1018 = vpack.c.b16 %v1006, %v1005
    %v1019 = vpack.c.b16 %v1008, %v1007
    %v1020 = vpack.c.b16 %v1010, %v1009
    %v1021 = vpack.c.b16 %v1012, %v1011
    %v1022 = vpack.c.b16 %v1014, %v1013
    %1031 = vmatprep.subr.bf16.mxu0 0
    %1032 = vmatpush1.bf16.xpose.msra.mxu0 %v1015
    %1033 = vmatprep.subr.bf16.mxu0 0
    %1034 = vmatpush1.bf16.xpose.msra.mxu0 %v1016
    %1035 = vmatprep.subr.bf16.mxu0 0
    %1036 = vmatpush1.bf16.xpose.msra.mxu0 %v1017
    %1037 = vmatprep.subr.bf16.mxu0 0
    %1038 = vmatpush1.bf16.xpose.msra.mxu0 %v1018
    %1039 = vmatprep.subr.bf16.mxu0 0
    %1040 = vmatpush1.bf16.xpose.msra.mxu0 %v1019
    %1041 = vmatprep.subr.bf16.mxu0 0
    %1042 = vmatpush1.bf16.xpose.msra.mxu0 %v1020
    %1043 = vmatprep.subr.bf16.mxu0 0
    %1044 = vmatpush1.bf16.xpose.msra.mxu0 %v1021
    %1045 = vmatprep.subr.bf16.mxu0 0
    %1046 = vmatpush1.bf16.xpose.msra.mxu0 %v1022
    %1047 = vmatprep.subr.bf16.mxu0 0
    %1048 = vmatpush1.bf16.xpose.msra.mxu0 0
    %1049 = vmatprep.subr.bf16.mxu0 0
    %1050 = vmatpush1.bf16.xpose.msra.mxu0 0
    %1051 = vmatprep.subr.bf16.mxu0 0
    %1052 = vmatpush1.bf16.xpose.msra.mxu0 0
    %1053 = vmatprep.subr.bf16.mxu0 0
    %1054 = vmatpush1.bf16.xpose.msra.mxu0 0
    %1055 = vmatprep.subr.bf16.mxu0 0
    %1056 = vmatpush1.bf16.xpose.msra.mxu0 0
    %1057 = vmatprep.subr.bf16.mxu0 0
    %1058 = vmatpush1.bf16.xpose.msra.mxu0 0
    %1059 = vmatprep.subr.bf16.mxu0 0
    %1060 = vmatpush1.bf16.xpose.msra.mxu0 0
    %1061 = vmatprep.subr.bf16.mxu0 0
    %1062 = vmatpush1.bf16.xpose.msra.mxu0 0
    %1063 = vmatprep.mubr.bf16.mxu0 0
    %1064 = vmatmul.mubr.bf16.gmra.mrb[0].mxu0 %v966
    %v1065 = vpop.f32.mrb[0].mxu0
    %v1066 = vadd.f32 0.0, %v1065
    %v1067 = vpop.f32.mrb[0].mxu0
    %v1068 = vpop.f32.mrb[0].mxu0
    %v1069 = vadd.f32 0.0, %v1068
    %v1070 = vpop.f32.mrb[0].mxu0
    %1071 = vdwg.mxu0
    %1072 = vst [vmem:[#allocation18] sm:$0xff] %v1066
    %1073 = vst [vmem:[#allocation18 + $0x8] sm:$0xff] %v1069
    // Predicated region
    $region70: #{tpu_custom_call.1} parent=1 // pred_check
      _
    $region71: #{tpu_custom_call.1} parent=1 // pred_check_branch
      %1075 = sbr.rel (0) target = $region73
    $region72: #{tpu_custom_call.1} parent=1 // pred_region
      %s1077 = ssub.s32 256, 256
      %1078 = vsyncadd [#allocation5], %s1077
      %s1079 = sshll.u32 [#allocation17], 4
      %s1080 = int_to_ptr.vmem [resolvable:$true] %s1079
      %1085 = dma.vmem_to_hbm [thread:$0]  %s1080, 256, %s9, [#allocation5], 128, 128, 8
    $region73: #{tpu_custom_call.1} parent=1 // pred_fallthru
      _
    // Predicated region
    $region74: #{tpu_custom_call.1} parent=1 // pred_check
      _
    $region75: #{tpu_custom_call.1} parent=1 // pred_check_branch
      %1087 = sbr.rel (0) target = $region77
    $region76: #{tpu_custom_call.1} parent=1 // pred_region
      %s1089 = ssub.s32 256, 256
      %1090 = vsyncadd [#allocation19], %s1089
      %s1091 = sshll.u32 [#allocation18], 4
      %s1092 = int_to_ptr.vmem [resolvable:$true] %s1091
      %1097 = dma.vmem_to_hbm [thread:$0]  %s1092, 256, %s10, [#allocation19], 128, 128, 8
    $region77: #{tpu_custom_call.1} parent=1 // pred_fallthru
      _
    // Predicated region
    $region78: #{tpu_custom_call.1} parent=1 // pred_check
      _
    $region79: #{tpu_custom_call.1} parent=1 // pred_check_branch
      %1099 = sbr.rel (0) target = $region81
    $region80: #{tpu_custom_call.1} parent=1 // pred_region
      %1100 = dma.done [#allocation5], 256
    $region81: #{tpu_custom_call.1} parent=1 // pred_fallthru
      _
    // Predicated region
    $region82: #{tpu_custom_call.1} parent=1 // pred_check
      _
    $region83: #{tpu_custom_call.1} parent=1 // pred_check_branch
      %1102 = sbr.rel (0) target = $region85
    $region84: #{tpu_custom_call.1} parent=1 // pred_region
      %1103 = dma.done [#allocation19], 256
    $region85: #{tpu_custom_call.1} parent=1 // pred_fallthru
      _
    %1104 = vsyncpa [#allocation4], 1
    %1105 = vsyncpa [#allocation7], 1
    %1106 = vsyncpa [#allocation10], 1
    %1107 = vsyncpa [#allocation13], 1
    %1108 = vsyncpa [#allocation16], 1
    %1109 = vsyncpa [#allocation5], 1
    %1110 = vsyncpa [#allocation19], 1

</llo_original>
